<compile_context>
chip_gen: v5e
topology: v5e:2x2
jax: 0.10.0
libtpu: 0.0.40
codegen_flags: <defaults>
</compile_context>

<pallas_src>
import jax
import jax.numpy as jnp
from jax.experimental import pallas as pl
from jax.experimental.pallas import tpu as pltpu


# --------------------------------- Pallas kernel ---------------------------------------

def _make_conv_kernel(C_in_g, K, stride, Tt, apply_act, vpu_reduce, negative_slope=0.2):
    """One (batch, group, T-tile, C_out-tile) step of a grouped strided Conv1d + bias
    (+ LeakyReLU).  Taps are gathered into a (K*C_in_g, Tt) slab and contracted in one
    MXU dot (or a VPU/XLU reduction for the 1-output-channel final layer)."""

    def kernel(x_ref, w_ref, b_ref, o_ref):
        # x_ref: (1, 1, 1, stride*C_in_g, Tt + (K-1)//stride)  phase-decomposed input tile
        # w_ref: (1, co_t, K*C_in_g)            folded weights   (or (1, K*C_in_g, 1))
        # b_ref: (1, co_t, 1)                   bias
        # o_ref: (1, 1, co_t, Tt)               output tile
        taps = []
        for k in range(K):                      # static unroll of K slice ops (<= ~41)
            q, r = k // stride, k % stride
            taps.append(x_ref[0, 0, 0, r * C_in_g:(r + 1) * C_in_g, q:q + Tt])
        slab = taps[0] if K == 1 else jnp.concatenate(taps, axis=0)   # (K*C_in_g, Tt)

        if vpu_reduce:
            # final Conv1d(C_in, 1, K): avoid a pathological M=1 matmul; do it as a
            # broadcast-multiply + sublane reduction on VPU/XLU (f32 throughout).
            acc = jnp.sum(w_ref[0].astype(jnp.float32) * slab.astype(jnp.float32),
                          axis=0, keepdims=True)                      # (1, Tt)
        else:
            acc = jnp.dot(w_ref[0], slab,
                          preferred_element_type=jnp.float32)         # (co_t, Tt)

        acc = acc + b_ref[0]
        if apply_act:
            acc = jnp.where(acc >= 0, acc, negative_slope * acc)
        o_ref[0, 0] = acc.astype(o_ref.dtype)

    return kernel


def conv1d_pallas(x, w, b, *, stride, padding, groups, pad_mode, apply_act,
                  compute_dtype=jnp.float32):
    """Grouped strided 1D conv (+ optional LeakyReLU(0.2)) via a Pallas TPU kernel."""
    B, C_in, T_in = x.shape
    C_out, C_in_g, K = w.shape
    G, S = groups, stride
    assert C_in == C_in_g * G and C_out % G == 0
    C_out_g = C_out // G

    # ---- JAX glue: conv padding ----
    if padding > 0:
        mode = 'reflect' if pad_mode == 'reflect' else 'constant'
        xp = jnp.pad(x, ((0, 0), (0, 0), (padding, padding)), mode=mode)
    else:
        xp = x
    L = T_in + 2 * padding
    T_out = (L - K) // S + 1
    Q = (K - 1) // S                              # lane halo in phase-decomposed coords

    # Lane tiling: pad T_out up to multiples of 128 so stores are lane-dense/unmasked.
    Tt = min(512, 128 * pl.cdiv(T_out, 128))
    n_t = pl.cdiv(T_out, Tt)
    T_pad = n_t * Tt
    M_pad = T_pad + Q
    assert Q + T_pad <= M_pad                     # every tap read stays inside its block

    # ---- JAX glue: per-group stride-phase decomposition ----
    # x_ph[b, g, r*C_in_g + ci, m] == x_padded[b, g*C_in_g + ci, S*m + r]
    total = S * M_pad
    if total >= L:
        xpp = jnp.pad(xp, ((0, 0), (0, 0), (0, total - L)))
    else:
        xpp = xp[:, :, :total]                    # dropped tail only feeds t >= T_out
    x_ph = (xpp.reshape(B, G, C_in_g, M_pad, S)
               .transpose(0, 1, 4, 2, 3)
               .reshape(B, G, S * C_in_g, M_pad))
    # T tiles with a Q-lane halo so the kernel only needs static slices.
    if n_t == 1:
        x_tiles = x_ph[:, :, None]                                        # no copy
    else:
        # TODO(synk): for very long sequences this duplicates Q lanes per tile in HBM;
        # a halo-aware input BlockSpec would avoid this extra copy.
        x_tiles = jnp.concatenate(
            [x_ph[:, :, None, :, t * Tt:t * Tt + Tt + Q] for t in range(n_t)], axis=2)
    x_tiles = x_tiles.astype(compute_dtype)

    # ---- fold the K taps into the contraction: cols ordered (k, c_in) ----
    KC = K * C_in_g
    w_fold = (w.reshape(G, C_out_g, C_in_g, K)
                .transpose(0, 1, 3, 2)
                .reshape(G, C_out_g, KC))
    b_arr = b.reshape(G, C_out_g, 1).astype(jnp.float32)

    vpu_reduce = (C_out == 1 and G == 1)          # final 1-channel conv
    if C_out_g > 256 and C_out_g % 256 == 0:
        co_t = 256                                # C_out tiling for wide dense layers
    else:
        co_t = C_out_g
    n_co = C_out_g // co_t

    if vpu_reduce:
        w_arr = w_fold.reshape(1, KC, 1).astype(jnp.float32)
        w_spec = pl.BlockSpec((1, KC, 1), lambda bi, gi, ti, ci: (0, 0, 0))
    else:
        w_arr = w_fold.astype(compute_dtype)
        w_spec = pl.BlockSpec((1, co_t, KC), lambda bi, gi, ti, ci: (gi, ci, 0))

    kernel = _make_conv_kernel(C_in_g, K, S, Tt, apply_act, vpu_reduce)

    grid = (B, G, n_t, n_co)                      # all independent -> all 'parallel'
    in_specs = [
        pl.BlockSpec((1, 1, 1, S * C_in_g, Tt + Q),
                     lambda bi, gi, ti, ci: (bi, gi, ti, 0, 0)),
        w_spec,
        pl.BlockSpec((1, co_t, 1), lambda bi, gi, ti, ci: (gi, ci, 0)),
    ]
    out_spec = pl.BlockSpec((1, 1, co_t, Tt), lambda bi, gi, ti, ci: (bi, gi, ci, ti))

    # compiler hints: rough VMEM budget (v5e scoped default is 16 MiB) + cost estimate
    isz = jnp.dtype(compute_dtype).itemsize
    blk_bytes = (S * C_in_g * (Tt + Q) * isz + co_t * KC * isz
                 + co_t * 4 + co_t * Tt * 4)
    slab_bytes = KC * Tt * max(isz, 4)
    est = 2 * blk_bytes + 3 * slab_bytes
    vmem_limit = int(min(64 * 2**20, max(32 * 2**20, 4 * est)))
    cost = pl.CostEstimate(
        flops=int(2 * B * C_out * T_out * C_in_g * K),
        transcendentals=0,
        bytes_accessed=int(x_tiles.size * isz + w_arr.size * w_arr.dtype.itemsize
                           + b_arr.size * 4 + B * C_out * T_pad * 4))

    out = pl.pallas_call(
        kernel,
        out_shape=jax.ShapeDtypeStruct((B, G, C_out_g, T_pad), jnp.float32),
        grid=grid,
        in_specs=in_specs,
        out_specs=out_spec,
        compiler_params=pltpu.CompilerParams(
            dimension_semantics=("parallel", "parallel", "parallel", "parallel"),
            vmem_limit_bytes=vmem_limit),
        cost_estimate=cost,
    )(x_tiles, w_arr, b_arr)

    return out.reshape(B, C_out, T_pad)[:, :, :T_out]


# ------------------- parameter construction (deterministic, synthetic) -------------------

def build_discriminator(key, ndf, n_layers, downsampling_factor):
    cfgs, params = [], []

    def wn_conv_params(k, c_in_g, c_out, ksz):
        k1, k2, k3 = jax.random.split(k, 3)
        v = jax.random.normal(k1, (c_out, c_in_g, ksz), jnp.float32) * 0.1
        g = 0.5 + jax.random.uniform(k2, (c_out, 1, 1), jnp.float32)
        bias = jax.random.normal(k3, (c_out,), jnp.float32) * 0.05
        return dict(v=v, g=g, b=bias, wn=True)

    def conv_params(k, c_in, c_out, ksz):
        k1, k2 = jax.random.split(k)
        w = jax.random.normal(k1, (c_out, c_in, ksz), jnp.float32) * 0.1
        bias = jax.random.normal(k2, (c_out,), jnp.float32) * 0.05
        return dict(v=w, g=None, b=bias, wn=False)

    keys = jax.random.split(key, n_layers + 3)

    # layer_0: ReflectionPad1d(7) + WNConv1d(1, ndf, 15) + LeakyReLU(0.2)
    cfgs.append(dict(stride=1, padding=7, groups=1, pad_mode='reflect', apply_act=True))
    params.append(wn_conv_params(keys[0], 1, ndf, 15))

    nf = ndf
    stride = downsampling_factor
    n = 0
    for n in range(1, n_layers + 1):
        nf_prev = nf
        nf = min(nf * stride, 1024)
        groups = nf_prev // 4
        cfgs.append(dict(stride=stride, padding=stride * 5, groups=groups,
                         pad_mode='zeros', apply_act=True))
        params.append(wn_conv_params(keys[n], nf_prev // groups, nf, stride * 10 + 1))

    nf_prev = nf
    nf = min(nf * 2, 1024)
    cfgs.append(dict(stride=1, padding=2, groups=1, pad_mode='zeros', apply_act=True))
    params.append(wn_conv_params(keys[n_layers + 1], nf_prev, nf, 5))

    # final plain Conv1d(nf, 1, 3, padding=1), no activation
    cfgs.append(dict(stride=1, padding=1, groups=1, pad_mode='zeros', apply_act=False))
    params.append(conv_params(keys[n_layers + 2], nf, 1, 3))

    return params, cfgs


def effective_weight(p):
    # weight_norm: w = g * v / ||v||, norm over (in, k) per output channel (dim=0 default)
    if p['wn']:
        norm = jnp.sqrt(jnp.sum(p['v'] ** 2, axis=(1, 2), keepdims=True))
        return p['g'] * p['v'] / norm
    return p['v']


def nlayer_discriminator_forward(x, params, cfgs, compute_dtype=jnp.float32):
    results = []
    for p, cfg in zip(params, cfgs):
        w = effective_weight(p)
        x = conv1d_pallas(x, w, p['b'], compute_dtype=compute_dtype, **cfg)
        # x.view(-1, 1).detach()  ->  reshape + stop_gradient (glue)
        results.append(jax.lax.stop_gradient(x).reshape(-1, 1))
    return results


# ----------------------------- pure-JAX reference for checking ---------------------------

def conv1d_ref(x, w, b, *, stride, padding, groups, pad_mode, apply_act):
    if pad_mode == 'reflect':
        x = jnp.pad(x, ((0, 0), (0, 0), (padding, padding)), mode='reflect')
        pads = [(0, 0)]
    else:
        pads = [(padding, padding)]
    y = jax.lax.conv_general_dilated(x, w, (stride,), pads,
                                     dimension_numbers=('NCH', 'OIH', 'NCH'),
                                     feature_group_count=groups)
    y = y + b[None, :, None]
    if apply_act:
        y = jnp.where(y >= 0, y, 0.2 * y)
    return y


if __name__ == "__main__":
    key = jax.random.PRNGKey(0)
    kx, kp = jax.random.split(key)

    # small config consistent with the module: ndf=8, n_layers=2, downsampling_factor=2
    ndf, n_layers, downsampling_factor = 8, 2, 2
    B, T = 2, 64
    x = jax.random.normal(kx, (B, 1, T), jnp.float32)

    params, cfgs = build_discriminator(kp, ndf, n_layers, downsampling_factor)

    # f32 MXU path: strict check against the pure-JAX reference of the same module.
    results = nlayer_discriminator_forward(x, params, cfgs, compute_dtype=jnp.float32)
    results = [jax.block_until_ready(r) for r in results]

    xr = x
    ok = True
    for p, cfg, r in zip(params, cfgs, results):
        w = effective_weight(p)
        xr = conv1d_ref(xr, w, p['b'], **cfg)
        ok = ok and bool(jnp.allclose(xr.reshape(-1, 1), r, atol=1e-4, rtol=1e-4))

    # bf16 MXU path (v6e/v7x perf recommendation): exercise it + finite-output sanity check.
    results_bf16 = nlayer_discriminator_forward(x, params, cfgs, compute_dtype=jnp.bfloat16)
    results_bf16 = [jax.block_until_ready(r) for r in results_bf16]
    ok = ok and all(bool(jnp.isfinite(r).all()) for r in results_bf16)

    if ok:
        print("KERNEL_OK")
    else:
        print("MISMATCH")
</pallas_src>

<mosaic_0001>
module attributes {stable_mosaic.version = 11 : i64} {
  func.func @kernel(%arg0: i32, %arg1: i32, %arg2: i32, %arg3: i32, %arg4: memref<1x1x1x1x142xf32, #tpu.memory_space<vmem>>, %arg5: memref<1x8x15xf32, #tpu.memory_space<vmem>>, %arg6: memref<1x8x1xf32, #tpu.memory_space<vmem>>, %arg7: memref<1x1x8x128xf32, #tpu.memory_space<vmem>>) attributes {dimension_semantics = [#tpu.dimension_semantics<parallel>, #tpu.dimension_semantics<parallel>, #tpu.dimension_semantics<parallel>, #tpu.dimension_semantics<parallel>], iteration_bounds = array<i64: 2, 1, 1, 1>, scalar_prefetch = 0 : i64, scratch_operands = 0 : i64, tpu.core_type = #tpu.core_type<tc>, window_params = [{transform_indices = @transform_0, window_bounds = array<i64: 1, 1, 1, 1, 142>}, {transform_indices = @transform_1, window_bounds = array<i64: 1, 8, 15>}, {transform_indices = @transform_2, window_bounds = array<i64: 1, 8, 1>}, {transform_indices = @transform_3, window_bounds = array<i64: 1, 1, 8, 128>}]} {
    %c0 = arith.constant 0 : index
    %c0_0 = arith.constant 0 : index
    %c0_1 = arith.constant 0 : index
    %c0_2 = arith.constant 0 : index
    %c0_3 = arith.constant 0 : index
    %0 = vector.load %arg4[%c0, %c0_0, %c0_1, %c0_2, %c0_3] : memref<1x1x1x1x142xf32, #tpu.memory_space<vmem>>, vector<1x1x1x1x128xf32>
    %1 = vector.shape_cast %0 : vector<1x1x1x1x128xf32> to vector<1x128xf32>
    %c0_4 = arith.constant 0 : index
    %c0_5 = arith.constant 0 : index
    %c0_6 = arith.constant 0 : index
    %c0_7 = arith.constant 0 : index
    %c1 = arith.constant 1 : index
    %2 = vector.load %arg4[%c0_4, %c0_5, %c0_6, %c0_7, %c1] : memref<1x1x1x1x142xf32, #tpu.memory_space<vmem>>, vector<1x1x1x1x128xf32>
    %3 = vector.shape_cast %2 : vector<1x1x1x1x128xf32> to vector<1x128xf32>
    %c0_8 = arith.constant 0 : index
    %c0_9 = arith.constant 0 : index
    %c0_10 = arith.constant 0 : index
    %c0_11 = arith.constant 0 : index
    %c2 = arith.constant 2 : index
    %4 = vector.load %arg4[%c0_8, %c0_9, %c0_10, %c0_11, %c2] : memref<1x1x1x1x142xf32, #tpu.memory_space<vmem>>, vector<1x1x1x1x128xf32>
    %5 = vector.shape_cast %4 : vector<1x1x1x1x128xf32> to vector<1x128xf32>
    %c0_12 = arith.constant 0 : index
    %c0_13 = arith.constant 0 : index
    %c0_14 = arith.constant 0 : index
    %c0_15 = arith.constant 0 : index
    %c3 = arith.constant 3 : index
    %6 = vector.load %arg4[%c0_12, %c0_13, %c0_14, %c0_15, %c3] : memref<1x1x1x1x142xf32, #tpu.memory_space<vmem>>, vector<1x1x1x1x128xf32>
    %7 = vector.shape_cast %6 : vector<1x1x1x1x128xf32> to vector<1x128xf32>
    %c0_16 = arith.constant 0 : index
    %c0_17 = arith.constant 0 : index
    %c0_18 = arith.constant 0 : index
    %c0_19 = arith.constant 0 : index
    %c4 = arith.constant 4 : index
    %8 = vector.load %arg4[%c0_16, %c0_17, %c0_18, %c0_19, %c4] : memref<1x1x1x1x142xf32, #tpu.memory_space<vmem>>, vector<1x1x1x1x128xf32>
    %9 = vector.shape_cast %8 : vector<1x1x1x1x128xf32> to vector<1x128xf32>
    %c0_20 = arith.constant 0 : index
    %c0_21 = arith.constant 0 : index
    %c0_22 = arith.constant 0 : index
    %c0_23 = arith.constant 0 : index
    %c5 = arith.constant 5 : index
    %10 = vector.load %arg4[%c0_20, %c0_21, %c0_22, %c0_23, %c5] : memref<1x1x1x1x142xf32, #tpu.memory_space<vmem>>, vector<1x1x1x1x128xf32>
    %11 = vector.shape_cast %10 : vector<1x1x1x1x128xf32> to vector<1x128xf32>
    %c0_24 = arith.constant 0 : index
    %c0_25 = arith.constant 0 : index
    %c0_26 = arith.constant 0 : index
    %c0_27 = arith.constant 0 : index
    %c6 = arith.constant 6 : index
    %12 = vector.load %arg4[%c0_24, %c0_25, %c0_26, %c0_27, %c6] : memref<1x1x1x1x142xf32, #tpu.memory_space<vmem>>, vector<1x1x1x1x128xf32>
    %13 = vector.shape_cast %12 : vector<1x1x1x1x128xf32> to vector<1x128xf32>
    %c0_28 = arith.constant 0 : index
    %c0_29 = arith.constant 0 : index
    %c0_30 = arith.constant 0 : index
    %c0_31 = arith.constant 0 : index
    %c7 = arith.constant 7 : index
    %14 = vector.load %arg4[%c0_28, %c0_29, %c0_30, %c0_31, %c7] : memref<1x1x1x1x142xf32, #tpu.memory_space<vmem>>, vector<1x1x1x1x128xf32>
    %15 = vector.shape_cast %14 : vector<1x1x1x1x128xf32> to vector<1x128xf32>
    %c0_32 = arith.constant 0 : index
    %c0_33 = arith.constant 0 : index
    %c0_34 = arith.constant 0 : index
    %c0_35 = arith.constant 0 : index
    %c8 = arith.constant 8 : index
    %16 = vector.load %arg4[%c0_32, %c0_33, %c0_34, %c0_35, %c8] : memref<1x1x1x1x142xf32, #tpu.memory_space<vmem>>, vector<1x1x1x1x128xf32>
    %17 = vector.shape_cast %16 : vector<1x1x1x1x128xf32> to vector<1x128xf32>
    %c0_36 = arith.constant 0 : index
    %c0_37 = arith.constant 0 : index
    %c0_38 = arith.constant 0 : index
    %c0_39 = arith.constant 0 : index
    %c9 = arith.constant 9 : index
    %18 = vector.load %arg4[%c0_36, %c0_37, %c0_38, %c0_39, %c9] : memref<1x1x1x1x142xf32, #tpu.memory_space<vmem>>, vector<1x1x1x1x128xf32>
    %19 = vector.shape_cast %18 : vector<1x1x1x1x128xf32> to vector<1x128xf32>
    %c0_40 = arith.constant 0 : index
    %c0_41 = arith.constant 0 : index
    %c0_42 = arith.constant 0 : index
    %c0_43 = arith.constant 0 : index
    %c10 = arith.constant 10 : index
    %20 = vector.load %arg4[%c0_40, %c0_41, %c0_42, %c0_43, %c10] : memref<1x1x1x1x142xf32, #tpu.memory_space<vmem>>, vector<1x1x1x1x128xf32>
    %21 = vector.shape_cast %20 : vector<1x1x1x1x128xf32> to vector<1x128xf32>
    %c0_44 = arith.constant 0 : index
    %c0_45 = arith.constant 0 : index
    %c0_46 = arith.constant 0 : index
    %c0_47 = arith.constant 0 : index
    %c11 = arith.constant 11 : index
    %22 = vector.load %arg4[%c0_44, %c0_45, %c0_46, %c0_47, %c11] : memref<1x1x1x1x142xf32, #tpu.memory_space<vmem>>, vector<1x1x1x1x128xf32>
    %23 = vector.shape_cast %22 : vector<1x1x1x1x128xf32> to vector<1x128xf32>
    %c0_48 = arith.constant 0 : index
    %c0_49 = arith.constant 0 : index
    %c0_50 = arith.constant 0 : index
    %c0_51 = arith.constant 0 : index
    %c12 = arith.constant 12 : index
    %24 = vector.load %arg4[%c0_48, %c0_49, %c0_50, %c0_51, %c12] : memref<1x1x1x1x142xf32, #tpu.memory_space<vmem>>, vector<1x1x1x1x128xf32>
    %25 = vector.shape_cast %24 : vector<1x1x1x1x128xf32> to vector<1x128xf32>
    %c0_52 = arith.constant 0 : index
    %c0_53 = arith.constant 0 : index
    %c0_54 = arith.constant 0 : index
    %c0_55 = arith.constant 0 : index
    %c13 = arith.constant 13 : index
    %26 = vector.load %arg4[%c0_52, %c0_53, %c0_54, %c0_55, %c13] : memref<1x1x1x1x142xf32, #tpu.memory_space<vmem>>, vector<1x1x1x1x128xf32>
    %27 = vector.shape_cast %26 : vector<1x1x1x1x128xf32> to vector<1x128xf32>
    %c0_56 = arith.constant 0 : index
    %c0_57 = arith.constant 0 : index
    %c0_58 = arith.constant 0 : index
    %c0_59 = arith.constant 0 : index
    %c14 = arith.constant 14 : index
    %28 = vector.load %arg4[%c0_56, %c0_57, %c0_58, %c0_59, %c14] : memref<1x1x1x1x142xf32, #tpu.memory_space<vmem>>, vector<1x1x1x1x128xf32>
    %29 = vector.shape_cast %28 : vector<1x1x1x1x128xf32> to vector<1x128xf32>
    %30 = tpu.concatenate %1, %3, %5, %7, %9, %11, %13, %15, %17, %19, %21, %23, %25, %27, %29 in 0 : vector<1x128xf32>, vector<1x128xf32>, vector<1x128xf32>, vector<1x128xf32>, vector<1x128xf32>, vector<1x128xf32>, vector<1x128xf32>, vector<1x128xf32>, vector<1x128xf32>, vector<1x128xf32>, vector<1x128xf32>, vector<1x128xf32>, vector<1x128xf32>, vector<1x128xf32>, vector<1x128xf32> -> vector<15x128xf32>
    %c0_60 = arith.constant 0 : index
    %c0_61 = arith.constant 0 : index
    %c0_62 = arith.constant 0 : index
    %31 = vector.load %arg5[%c0_60, %c0_61, %c0_62] : memref<1x8x15xf32, #tpu.memory_space<vmem>>, vector<1x8x15xf32>
    %32 = vector.shape_cast %31 : vector<1x8x15xf32> to vector<8x15xf32>
    %cst = arith.constant dense<0.000000e+00> : vector<8x128xf32>
    %33 = tpu.matmul %32, %30, %cst {dimension_numbers = #tpu.dot_dimension_numbers<[1], [0], [0], [1], [0, 0, 1, 1], [], []>} : vector<8x15xf32>, vector<15x128xf32>, vector<8x128xf32> -> vector<8x128xf32>
    %c0_63 = arith.constant 0 : index
    %c0_64 = arith.constant 0 : index
    %c0_65 = arith.constant 0 : index
    %34 = vector.load %arg6[%c0_63, %c0_64, %c0_65] : memref<1x8x1xf32, #tpu.memory_space<vmem>>, vector<1x8x1xf32>
    %35 = vector.shape_cast %34 : vector<1x8x1xf32> to vector<8x1xf32>
    %36 = vector.broadcast %35 : vector<8x1xf32> to vector<8x128xf32>
    %37 = arith.addf %33, %36 : vector<8x128xf32>
    %cst_66 = arith.constant 0.000000e+00 : f32
    %38 = vector.broadcast %cst_66 : f32 to vector<8x128xf32>
    %39 = arith.cmpf oge, %37, %38 : vector<8x128xf32>
    %cst_67 = arith.constant 2.000000e-01 : f32
    %40 = vector.broadcast %cst_67 : f32 to vector<8x128xf32>
    %41 = arith.mulf %40, %37 : vector<8x128xf32>
    %42 = arith.select %39, %37, %41 : vector<8x128xi1>, vector<8x128xf32>
    %c0_68 = arith.constant 0 : index
    %c0_69 = arith.constant 0 : index
    %c0_70 = arith.constant 0 : index
    %c0_71 = arith.constant 0 : index
    %43 = vector.load %arg7[%c0_68, %c0_69, %c0_70, %c0_71] : memref<1x1x8x128xf32, #tpu.memory_space<vmem>>, vector<1x1x8x128xf32>
    %44 = vector.shape_cast %43 : vector<1x1x8x128xf32> to vector<8x128xf32>
    %45 = vector.shape_cast %42 : vector<8x128xf32> to vector<1x1x8x128xf32>
    tpu.vector_store %arg7[%c0_68, %c0_69, %c0_70, %c0_71], %45 {strides = array<i32>} : memref<1x1x8x128xf32, #tpu.memory_space<vmem>>, vector<1x1x8x128xf32>,
    return
  }
  func.func @transform_0(%arg0: i32, %arg1: i32, %arg2: i32, %arg3: i32) -> (i32, i32, i32, i32, i32) {
    %c0_i32 = arith.constant 0 : i32
    %c0_i32_0 = arith.constant 0 : i32
    %c0_i32_1 = arith.constant 0 : i32
    return %arg0, %arg1, %arg2, %c0_i32, %c0_i32_0 : i32, i32, i32, i32, i32
  }
  func.func @transform_1(%arg0: i32, %arg1: i32, %arg2: i32, %arg3: i32) -> (i32, i32, i32) {
    %c0_i32 = arith.constant 0 : i32
    %c0_i32_0 = arith.constant 0 : i32
    return %arg1, %arg3, %c0_i32 : i32, i32, i32
  }
  func.func @transform_2(%arg0: i32, %arg1: i32, %arg2: i32, %arg3: i32) -> (i32, i32, i32) {
    %c0_i32 = arith.constant 0 : i32
    %c0_i32_0 = arith.constant 0 : i32
    return %arg1, %arg3, %c0_i32 : i32, i32, i32
  }
  func.func @transform_3(%arg0: i32, %arg1: i32, %arg2: i32, %arg3: i32) -> (i32, i32, i32, i32) {
    %c0_i32 = arith.constant 0 : i32
    return %arg0, %arg1, %arg3, %arg2 : i32, i32, i32, i32
  }
}

</mosaic_0001>

<llo_original>
// kernel: tpu_custom_call.1
$region0: #{tpu_custom_call.1}
  #allocation0 [shape = 'u32[]', space=smem, size = 0x4, offset = 0x4, fixed_abs, tag = 'smem constant byte address 0x4 - core index']
  #allocation1 [shape = 'u32[72,128]{1,0:T(1,128)}', space=vmem, size = 0x9000, scoped, tag = 'internal scratch']
  %s0 = inlined_call_operand.hbm [shape: f32[2,1,1,1,142], index: 0, kind: input, shape index: {}]
  %s1 = inlined_call_operand.vmem [shape: f32[1,8,15], index: 1, kind: input, shape index: {}]
  %s2 = inlined_call_operand.vmem [shape: f32[1,8,1], index: 2, kind: input, shape index: {}]
  %s3 = inlined_call_operand.hbm [shape: f32[2,1,8,128], index: 3, kind: output, shape index: {}]
  %s4 = sld [smem:[#allocation0]]
  $region49: #{tpu_custom_call.1} parent=0
    _
  %s6 = ssub.s32 1, %s4
  %s7 = scalar_select 0, %s6, %s4
  $region1: #{tpu_custom_call.1} parent=0
    #allocation2 [shape = 'u8[2048]{0}', space=vmem, size = 0x800, scoped, tag = 'input window, operand 0']
    #allocation3 [shape = 's32[2]{0}', space=sflag, size = 0x8, scoped, tag = 'scoped memory for tpu_custom_call.1']
    #allocation4 [shape = 's32[2]{0}', space=sflag, size = 0x8, scoped, tag = 'scoped memory for tpu_custom_call.1']
    #allocation5 [shape = 'u8[8192]{0}', space=vmem, size = 0x2000, scoped, tag = 'output window, operand 0']
    %8 = vsyncpa [#allocation3], 0
    %s9 = scalar_lea.sflag [#allocation3], 1
    %10 = vsyncpa %s9, 0
    %11 = vsyncpa [#allocation4], 0
    %s12 = scalar_lea.sflag [#allocation4], 1
    %13 = vsyncpa %s12, 0
    loop: start=0, step=1, limit=4
    $region2: #{tpu_custom_call.1} parent=1 // loop_pre_header
      _
    $region3: #{tpu_custom_call.1} parent=1 // loop_header
      %s15 = sphi 0, %s19
      %p16 = scmp.ge.s32.totalorder %s15, 4
      %s22 = sphi 0, %s48
      %s23 = sphi 0, %s44
      %s24 = sphi 0, %s40
      %s25 = sphi 0, %s36
      %s26 = sphi 0, %s22
      %s27 = sphi 0, %s23
      %s28 = sphi 0, %s24
      %s29 = sphi 0, %s25
      %s30 = sphi 0, %s26
      %s31 = sphi 0, %s27
      %s32 = sphi 0, %s28
      %s33 = sphi 0, %s29
      %s55 = sphi 0, %s57
      %s58 = sphi 0, %s55
      %s59 = sphi 0, %s58
      %s75 = sphi 0, %s59
      %s83 = sphi 0, %s85
      %s86 = sphi 0, %s83
      %s87 = sphi 0, %s86
      %s103 = sphi 0, %s87
      %s111 = sphi 0, %s113
      %s114 = sphi 0, %s111
      %s115 = sphi 0, %s114
      %s131 = sphi 0, %s115
      %s143 = sphi 0, %s145
      %s146 = sphi 0, %s143
      %s147 = sphi 0, %s146
      %s163 = sphi 0, %s147
    $region4: #{tpu_custom_call.1} parent=1 // loop_header_branch
      %18 = sbr.rel (%p16) target = $region8
    $region5: #{tpu_custom_call.1} parent=1 // loop_body
      %s20 = ssub.s32 %s15, 1
      %s21 = ssub.s32 %s15, 2
      %s34 = sadd.s32 1, %s25
      %p35 = scmp.ge.s32.totalorder %s34, 1
      %s36 = scalar_select %p35, 0, %s34
      %s37 = sadd.s32 1, %s24
      %s38 = scalar_select %p35, %s37, %s24
      %p39 = scmp.ge.s32.totalorder %s38, 1
      %s40 = scalar_select %p39, 0, %s38
      %s41 = sadd.s32 1, %s23
      %s42 = scalar_select %p39, %s41, %s23
      %p43 = scmp.ge.s32.totalorder %s42, 1
      %s44 = scalar_select %p43, 0, %s42
      %s45 = sadd.s32 1, %s22
      %s46 = scalar_select %p43, %s45, %s22
      %p47 = scmp.ge.s32.totalorder %s46, 2
      %s48 = scalar_select %p47, 0, %s46
      %s49 = ssub.s32 %s22, %s48
      %s50 = ssub.s32 %s23, %s44
      %s51 = sor.u32 %s49, %s50
      %s52 = ssub.s32 %s24, %s40
      %s53 = sor.u32 %s51, %s52
      %p54 = scmp.eq.s32.totalorder %s53, 0
      %s56 = sadd.s32 %s55, 1
      %s57 = scalar_select %p54, %s55, %s56
      %p60 = pneg %p54
      %p61 = scmp.eq.s32.totalorder %s15, 1
      %p62 = por %p60, %p61
      %p63 = scmp.ne.s32.totalorder %s55, %s58
      %p64 = scmp.eq.s32.totalorder %s15, 0
      %p65 = por %p63, %p64
      %p66 = scmp.ne.s32.totalorder %s55, %s58
      %p67 = scmp.eq.s32.totalorder %s20, 1
      %p68 = por %p66, %p67
      %p69 = scmp.ne.s32.totalorder %s58, %s59
      %p70 = scmp.eq.s32.totalorder %s20, 0
      %p71 = por %p69, %p70
      %p72 = scmp.ne.s32.totalorder %s58, %s59
      %p73 = scmp.eq.s32.totalorder %s21, 1
      %p74 = por %p72, %p73
      %p76 = scmp.ne.s32.totalorder %s59, %s75
      %p77 = scmp.eq.s32.totalorder %s21, 0
      %p78 = por %p76, %p77
      %s79 = ssub.s32 %s23, %s44
      %s80 = ssub.s32 %s25, %s36
      %s81 = sor.u32 %s79, %s80
      %p82 = scmp.eq.s32.totalorder %s81, 0
      %s84 = sadd.s32 %s83, 1
      %s85 = scalar_select %p82, %s83, %s84
      %p88 = pneg %p82
      %p89 = scmp.eq.s32.totalorder %s15, 1
      %p90 = por %p88, %p89
      %p91 = scmp.ne.s32.totalorder %s83, %s86
      %p92 = scmp.eq.s32.totalorder %s15, 0
      %p93 = por %p91, %p92
      %p94 = scmp.ne.s32.totalorder %s83, %s86
      %p95 = scmp.eq.s32.totalorder %s20, 1
      %p96 = por %p94, %p95
      %p97 = scmp.ne.s32.totalorder %s86, %s87
      %p98 = scmp.eq.s32.totalorder %s20, 0
      %p99 = por %p97, %p98
      %p100 = scmp.ne.s32.totalorder %s86, %s87
      %p101 = scmp.eq.s32.totalorder %s21, 1
      %p102 = por %p100, %p101
      %p104 = scmp.ne.s32.totalorder %s87, %s103
      %p105 = scmp.eq.s32.totalorder %s21, 0
      %p106 = por %p104, %p105
      %s107 = ssub.s32 %s23, %s44
      %s108 = ssub.s32 %s25, %s36
      %s109 = sor.u32 %s107, %s108
      %p110 = scmp.eq.s32.totalorder %s109, 0
      %s112 = sadd.s32 %s111, 1
      %s113 = scalar_select %p110, %s111, %s112
      %p116 = pneg %p110
      %p117 = scmp.eq.s32.totalorder %s15, 1
      %p118 = por %p116, %p117
      %p119 = scmp.ne.s32.totalorder %s111, %s114
      %p120 = scmp.eq.s32.totalorder %s15, 0
      %p121 = por %p119, %p120
      %p122 = scmp.ne.s32.totalorder %s111, %s114
      %p123 = scmp.eq.s32.totalorder %s20, 1
      %p124 = por %p122, %p123
      %p125 = scmp.ne.s32.totalorder %s114, %s115
      %p126 = scmp.eq.s32.totalorder %s20, 0
      %p127 = por %p125, %p126
      %p128 = scmp.ne.s32.totalorder %s114, %s115
      %p129 = scmp.eq.s32.totalorder %s21, 1
      %p130 = por %p128, %p129
      %p132 = scmp.ne.s32.totalorder %s115, %s131
      %p133 = scmp.eq.s32.totalorder %s21, 0
      %p134 = por %p132, %p133
      %s135 = ssub.s32 %s22, %s48
      %s136 = ssub.s32 %s23, %s44
      %s137 = sor.u32 %s135, %s136
      %s138 = ssub.s32 %s25, %s36
      %s139 = sor.u32 %s137, %s138
      %s140 = ssub.s32 %s24, %s40
      %s141 = sor.u32 %s139, %s140
      %p142 = scmp.eq.s32.totalorder %s141, 0
      %s144 = sadd.s32 %s143, 1
      %s145 = scalar_select %p142, %s143, %s144
      %p148 = pneg %p142
      %p149 = scmp.eq.s32.totalorder %s15, 1
      %p150 = por %p148, %p149
      %p151 = scmp.ne.s32.totalorder %s143, %s146
      %p152 = scmp.eq.s32.totalorder %s15, 0
      %p153 = por %p151, %p152
      %p154 = scmp.ne.s32.totalorder %s143, %s146
      %p155 = scmp.eq.s32.totalorder %s20, 1
      %p156 = por %p154, %p155
      %p157 = scmp.ne.s32.totalorder %s146, %s147
      %p158 = scmp.eq.s32.totalorder %s20, 0
      %p159 = por %p157, %p158
      %p160 = scmp.ne.s32.totalorder %s146, %s147
      %p161 = scmp.eq.s32.totalorder %s21, 1
      %p162 = por %p160, %p161
      %p164 = scmp.ne.s32.totalorder %s147, %s163
      %p165 = scmp.eq.s32.totalorder %s21, 0
      %p166 = por %p164, %p165
      %p167 = scmp.le.s32.totalorder 1, %s15
      %p168 = scmp.lt.s32.totalorder %s15, 3
      %p169 = pnand %p167, %p168
      %p170 = pneg %p169
      // Predicated region
      $region9: #{tpu_custom_call.1} parent=5 // pred_check
        _
      $region10: #{tpu_custom_call.1} parent=5 // pred_check_branch
        %172 = sbr.rel (%p169) target = $region12
      $region11: #{tpu_custom_call.1} parent=5 // pred_region
        %s173 = ssub.s32 %s15, 1
        // Predicated region
        $region13: #{tpu_custom_call.1} parent=11 // pred_check
          %p174 = pneg %p99
        $region14: #{tpu_custom_call.1} parent=11 // pred_check_branch
          %176 = sbr.rel (%p174) target = $region16
        $region15: #{tpu_custom_call.1} parent=11 // pred_region
          %p177 = scmp.lt.s32.totalorder %s27, 0
          %s178 = scalar_select %p177, %s27, 0
          %p179 = scmp.lt.s32.totalorder %s29, 0
          %s180 = scalar_select %p179, %s29, 0
          %s181 = sadd.s32 %s180, %s178
          %s182 = smul.addr %s181, 8
          %s183 = scalar_lea.vmem %s1, %s182
        $region16: #{tpu_custom_call.1} parent=11 // pred_fallthru
          _
        // Predicated region
        $region17: #{tpu_custom_call.1} parent=11 // pred_check
          %p184 = pneg %p127
        $region18: #{tpu_custom_call.1} parent=11 // pred_check_branch
          %186 = sbr.rel (%p184) target = $region20
        $region19: #{tpu_custom_call.1} parent=11 // pred_region
          %p187 = scmp.lt.s32.totalorder %s27, 0
          %s188 = scalar_select %p187, %s27, 0
          %p189 = scmp.lt.s32.totalorder %s29, 0
          %s190 = scalar_select %p189, %s29, 0
          %s191 = sadd.s32 %s190, %s188
          %s192 = smul.addr %s191, 8
          %s193 = scalar_lea.vmem %s2, %s192
        $region20: #{tpu_custom_call.1} parent=11 // pred_fallthru
          _
      $region12: #{tpu_custom_call.1} parent=5 // pred_fallthru
        _
      %p194 = scmp.lt.s32.totalorder %s15, 2
      // Predicated region
      $region21: #{tpu_custom_call.1} parent=5 // pred_check
        %p195 = pneg %p194
      $region22: #{tpu_custom_call.1} parent=5 // pred_check_branch
        %197 = sbr.rel (%p195) target = $region24
      $region23: #{tpu_custom_call.1} parent=5 // pred_region
        // Predicated region
        $region25: #{tpu_custom_call.1} parent=23 // pred_check
          %p198 = pneg %p65
        $region26: #{tpu_custom_call.1} parent=23 // pred_check_branch
          %200 = sbr.rel (%p198) target = $region28
        $region27: #{tpu_custom_call.1} parent=23 // pred_region
          %s201 = sand.u32 %s55, 1
          %s202 = scalar_lea.sflag [#allocation3], %s201
          %s203 = sand.u32 %s55, 1
          %s204 = smul.addr %s203, 2
          %s205 = scalar_lea.vmem [#allocation2], %s204
          %207 = vsyncadd %s202, 0
          %s208 = smul.addr %s24, 2
          %s209 = smul.addr %s23, 2
          %s210 = sadd.s32 %s208, %s209
          %s211 = smul.addr %s22, 2
          %s212 = sadd.s32 %s210, %s211
          %s213 = scalar_lea.hbm %s0, %s212
          %s215 = sshll.u32 %s213, 4
          %s216 = int_to_ptr.hbm [resolvable:$true] %s215
          %s217 = sshll.u32 %s205, 4
          %s218 = int_to_ptr.vmem [resolvable:$true] %s217
          %220 = dma.hbm_to_vmem [thread:$0]  %s216, 32, %s218, %s202
        $region28: #{tpu_custom_call.1} parent=23 // pred_fallthru
          _
      $region24: #{tpu_custom_call.1} parent=5 // pred_fallthru
        _
      %p221 = scmp.le.s32.totalorder 1, %s15
      %p222 = scmp.lt.s32.totalorder %s15, 3
      %p223 = pnand %p221, %p222
      %p224 = pneg %p223
      // Predicated region
      $region29: #{tpu_custom_call.1} parent=5 // pred_check
        _
      $region30: #{tpu_custom_call.1} parent=5 // pred_check_branch
        %226 = sbr.rel (%p223) target = $region32
      $region31: #{tpu_custom_call.1} parent=5 // pred_region
        %s227 = ssub.s32 %s15, 1
        %s228 = sand.u32 %s58, 1
        %s229 = scalar_lea.sflag [#allocation3], %s228
        %s230 = sand.u32 %s58, 1
        %s231 = smul.addr %s230, 2
        %s232 = scalar_lea.vmem [#allocation2], %s231
        // Predicated region
        $region33: #{tpu_custom_call.1} parent=31 // pred_check
          %p233 = pneg %p71
        $region34: #{tpu_custom_call.1} parent=31 // pred_check_branch
          %235 = sbr.rel (%p233) target = $region36
        $region35: #{tpu_custom_call.1} parent=31 // pred_region
          %237 = dma.done %s229, 32
        $region36: #{tpu_custom_call.1} parent=31 // pred_fallthru
          _
        %s238 = sand.u32 %s58, 1
        %s239 = scalar_lea.sflag [#allocation3], %s238
        %s240 = sand.u32 %s58, 1
        %s241 = smul.addr %s240, 2
        %s242 = scalar_lea.vmem [#allocation2], %s241
        %p243 = pneg %p71
        %p244 = pneg %p68
        %p245 = scmp.lt.s32.totalorder %s27, 0
        %s246 = scalar_select %p245, %s27, 0
        %p247 = scmp.lt.s32.totalorder %s29, 0
        %s248 = scalar_select %p247, %s29, 0
        %s249 = sadd.s32 %s248, %s246
        %s250 = smul.addr %s249, 8
        %s251 = scalar_lea.vmem %s1, %s250
        %p252 = pneg %p99
        %p253 = pneg %p96
        %p254 = scmp.lt.s32.totalorder %s27, 0
        %s255 = scalar_select %p254, %s27, 0
        %p256 = scmp.lt.s32.totalorder %s29, 0
        %s257 = scalar_select %p256, %s29, 0
        %s258 = sadd.s32 %s257, %s255
        %s259 = smul.addr %s258, 8
        %s260 = scalar_lea.vmem %s2, %s259
        %p261 = pneg %p127
        %p262 = pneg %p124
        %p263 = pneg %p159
        %p264 = pneg %p156
        %s265 = sand.u32 %s146, 1
        %s266 = scalar_lea.sflag [#allocation4], %s265
        %s267 = sand.u32 %s146, 1
        %s268 = smul.addr %s267, 8
        %s269 = scalar_lea.vmem [#allocation5], %s268
        %p270 = scmp.lt.s32.totalorder %s27, 0
        %s271 = scalar_select %p270, %s27, 0
        %p272 = scmp.lt.s32.totalorder %s29, 0
        %s273 = scalar_select %p272, %s29, 0
        %s274 = sadd.s32 %s273, %s271
        %s275 = smul.addr %s274, 8
        %s276 = scalar_lea.vmem %s1, %s275
        %p277 = scmp.lt.s32.totalorder %s27, 0
        %s278 = scalar_select %p277, %s27, 0
        %p279 = scmp.lt.s32.totalorder %s29, 0
        %s280 = scalar_select %p279, %s29, 0
        %s281 = sadd.s32 %s280, %s278
        %s282 = smul.addr %s281, 8
        %s283 = scalar_lea.vmem %s2, %s282
        %v284 = vld [vmem:[%s232] sm:$0x1]
        %v285 = vld [vmem:[%s232] sm:$0x3]
        %v287 = vperm.slane %v285, 0
        %v288 = vperm.slane %v285, 1
        %289 = vrot.lane.b32.xlu0 %v287, 127
        %v290 = vpop.permute.xlu0 %289
        %291 = vrot.lane.b32.xlu0 %v288, 127
        %v292 = vpop.permute.xlu0 %291
        %vm293 = vcmask 1039360
        %v294 = vsel %vm293, %v290, %v292
        %296 = vrot.lane.b32.xlu0 %v287, 126
        %v297 = vpop.permute.xlu0 %296
        %298 = vrot.lane.b32.xlu0 %v288, 126
        %v299 = vpop.permute.xlu0 %298
        %vm300 = vcmask 1031168
        %v301 = vsel %vm300, %v297, %v299
        %303 = vrot.lane.b32.xlu0 %v287, 125
        %v304 = vpop.permute.xlu0 %303
        %305 = vrot.lane.b32.xlu0 %v288, 125
        %v306 = vpop.permute.xlu0 %305
        %vm307 = vcmask 1022976
        %v308 = vsel %vm307, %v304, %v306
        %310 = vrot.lane.b32.xlu0 %v287, 124
        %v311 = vpop.permute.xlu0 %310
        %312 = vrot.lane.b32.xlu0 %v288, 124
        %v313 = vpop.permute.xlu0 %312
        %vm314 = vcmask 1014784
        %v315 = vsel %vm314, %v311, %v313
        %317 = vrot.lane.b32.xlu0 %v287, 123
        %v318 = vpop.permute.xlu0 %317
        %319 = vrot.lane.b32.xlu0 %v288, 123
        %v320 = vpop.permute.xlu0 %319
        %vm321 = vcmask 1006592
        %v322 = vsel %vm321, %v318, %v320
        %324 = vrot.lane.b32.xlu0 %v287, 122
        %v325 = vpop.permute.xlu0 %324
        %326 = vrot.lane.b32.xlu0 %v288, 122
        %v327 = vpop.permute.xlu0 %326
        %vm328 = vcmask 998400
        %v329 = vsel %vm328, %v325, %v327
        %331 = vrot.lane.b32.xlu0 %v287, 121
        %v332 = vpop.permute.xlu0 %331
        %333 = vrot.lane.b32.xlu0 %v288, 121
        %v334 = vpop.permute.xlu0 %333
        %vm335 = vcmask 990208
        %v336 = vsel %vm335, %v332, %v334
        %338 = vrot.lane.b32.xlu0 %v287, 120
        %v339 = vpop.permute.xlu0 %338
        %340 = vrot.lane.b32.xlu0 %v288, 120
        %v341 = vpop.permute.xlu0 %340
        %vm342 = vcmask 982016
        %v343 = vsel %vm342, %v339, %v341
        %345 = vrot.lane.b32.xlu0 %v287, 119
        %v346 = vpop.permute.xlu0 %345
        %347 = vrot.lane.b32.xlu0 %v288, 119
        %v348 = vpop.permute.xlu0 %347
        %vm349 = vcmask 973824
        %v350 = vsel %vm349, %v346, %v348
        %352 = vrot.lane.b32.xlu0 %v287, 118
        %v353 = vpop.permute.xlu0 %352
        %354 = vrot.lane.b32.xlu0 %v288, 118
        %v355 = vpop.permute.xlu0 %354
        %vm356 = vcmask 965632
        %v357 = vsel %vm356, %v353, %v355
        %359 = vrot.lane.b32.xlu0 %v287, 117
        %v360 = vpop.permute.xlu0 %359
        %361 = vrot.lane.b32.xlu0 %v288, 117
        %v362 = vpop.permute.xlu0 %361
        %vm363 = vcmask 957440
        %v364 = vsel %vm363, %v360, %v362
        %366 = vrot.lane.b32.xlu0 %v287, 116
        %v367 = vpop.permute.xlu0 %366
        %368 = vrot.lane.b32.xlu0 %v288, 116
        %v369 = vpop.permute.xlu0 %368
        %vm370 = vcmask 949248
        %v371 = vsel %vm370, %v367, %v369
        %373 = vrot.lane.b32.xlu0 %v287, 115
        %v374 = vpop.permute.xlu0 %373
        %375 = vrot.lane.b32.xlu0 %v288, 115
        %v376 = vpop.permute.xlu0 %375
        %vm377 = vcmask 941056
        %v378 = vsel %vm377, %v374, %v376
        %380 = vrot.lane.b32.xlu0 %v287, 114
        %v381 = vpop.permute.xlu0 %380
        %382 = vrot.lane.b32.xlu0 %v288, 114
        %v383 = vpop.permute.xlu0 %382
        %vm384 = vcmask 932864
        %v385 = vsel %vm384, %v381, %v383
        %vm387 = vcmask 1040384
        %v388 = vsel %vm387, %v284, %v294
        %vm389 = vcmask 1041408
        %v390 = vsel %vm389, %v388, %v301
        %vm391 = vcmask 1042432
        %v392 = vsel %vm391, %v390, %v308
        %vm393 = vcmask 1043456
        %v394 = vsel %vm393, %v392, %v315
        %vm395 = vcmask 1044480
        %v396 = vsel %vm395, %v394, %v322
        %vm397 = vcmask 1045504
        %v398 = vsel %vm397, %v396, %v329
        %vm399 = vcmask 1046528
        %v400 = vsel %vm399, %v398, %v336
        %v401 = vsel %vm387, %v343, %v350
        %v402 = vsel %vm389, %v401, %v357
        %v403 = vsel %vm391, %v402, %v364
        %v404 = vsel %vm393, %v403, %v371
        %v405 = vsel %vm395, %v404, %v378
        %v406 = vsel %vm397, %v405, %v385
        %v407 = vld [vmem:[%s276] sm:$0xff]
        %v408 = vld [vmem:[%s283] sm:$0xff]
        %410 = vset.pattern.permute.xlu0 0
        %411 = vperm.xlu0 %410, %v408
        %v412 = vpop.permute.xlu0 %411
        %vm414 = vcmask 121856
        %v416 = vsel %vm414, %v407, 0
        %v419 = vsel %vm399, %v406, 0
        %421 = vmatpush.msra.mxu0 0.0
        %422 = vmatpush.msra.mxu0 0.0
        %423 = vmatpush.msra.mxu0 0.0
        %424 = vmatpush.msra.mxu0 0.0
        %425 = vmatpush.msra.mxu0 0.0
        %426 = vmatpush.msra.mxu0 0.0
        %427 = vmatpush.msra.mxu0 0.0
        %428 = vmatpush.msra.mxu0 0.0
        %429 = vmatpush.msra.mxu0 0.0
        %430 = vmatpush.msra.mxu0 0.0
        %431 = vmatpush.msra.mxu0 0.0
        %432 = vmatpush.msra.mxu0 0.0
        %433 = vmatpush.msra.mxu0 0.0
        %434 = vmatpush.msra.mxu0 0.0
        %435 = vmatpush.msra.mxu0 %v419
        %436 = vmatpush.msra.mxu0 %v400
        %437 = vmatmul.f32.gmra.mxu0 %v416
        %v438 = vpop.f32.mrf.mxu0
        %v439 = vadd.f32 %v412, %v438
        %440 = vdwg.mxu0
        %vm441 = vcmp.ge.f32.partialorder %v439, 0.0
        %v442 = vmul.f32 %v439, 0.2
        %v443 = vsel %vm441, %v439, %v442
        %444 = vst [vmem:[%s269] sm:$0xff] %v443
        %s445 = sand.u32 %s146, 1
        %s446 = scalar_lea.sflag [#allocation4], %s445
        %s447 = sand.u32 %s146, 1
        %s448 = smul.addr %s447, 8
        %s449 = scalar_lea.vmem [#allocation5], %s448
        // Predicated region
        $region37: #{tpu_custom_call.1} parent=31 // pred_check
          %p450 = pneg %p156
        $region38: #{tpu_custom_call.1} parent=31 // pred_check_branch
          %452 = sbr.rel (%p450) target = $region40
        $region39: #{tpu_custom_call.1} parent=31 // pred_region
          %454 = vsyncadd %s446, 0
          %s455 = sadd.s32 %s28, %s29
          %s456 = sadd.s32 %s455, %s27
          %s457 = sadd.s32 %s456, %s26
          %s458 = smul.addr %s457, 8
          %s459 = scalar_lea.hbm %s3, %s458
          %s461 = sshll.u32 %s449, 4
          %s462 = int_to_ptr.vmem [resolvable:$true] %s461
          %s463 = sshll.u32 %s459, 4
          %s464 = int_to_ptr.hbm [resolvable:$true] %s463
          %466 = dma.vmem_to_hbm [thread:$0]  %s462, 128, %s464, %s446
        $region40: #{tpu_custom_call.1} parent=31 // pred_fallthru
          _
      $region32: #{tpu_custom_call.1} parent=5 // pred_fallthru
        _
      %p467 = scmp.le.s32.totalorder 2, %s15
      // Predicated region
      $region41: #{tpu_custom_call.1} parent=5 // pred_check
        %p468 = pneg %p467
      $region42: #{tpu_custom_call.1} parent=5 // pred_check_branch
        %470 = sbr.rel (%p468) target = $region44
      $region43: #{tpu_custom_call.1} parent=5 // pred_region
        %s471 = ssub.s32 %s15, 2
        // Predicated region
        $region45: #{tpu_custom_call.1} parent=43 // pred_check
          %p472 = pneg %p162
        $region46: #{tpu_custom_call.1} parent=43 // pred_check_branch
          %474 = sbr.rel (%p472) target = $region48
        $region47: #{tpu_custom_call.1} parent=43 // pred_region
          %s475 = sand.u32 %s147, 1
          %s476 = scalar_lea.sflag [#allocation4], %s475
          %s477 = sand.u32 %s147, 1
          %s478 = smul.addr %s477, 8
          %s479 = scalar_lea.vmem [#allocation5], %s478
          %481 = dma.done %s476, 128
        $region48: #{tpu_custom_call.1} parent=43 // pred_fallthru
          _
      $region44: #{tpu_custom_call.1} parent=5 // pred_fallthru
        _
    $region6: #{tpu_custom_call.1} parent=1 // loop_footer
      %s19 = sadd.s32 1, %s15
    $region7: #{tpu_custom_call.1} parent=1 // loop_footer_branch
      %14 = sbr.rel target = $region3
    $region8: #{tpu_custom_call.1} parent=1 // loop_exit
      _
    %482 = vsyncpa [#allocation3], 1
    %s483 = scalar_lea.sflag [#allocation3], 1
    %484 = vsyncpa %s483, 1
    %485 = vsyncpa [#allocation4], 1
    %s486 = scalar_lea.sflag [#allocation4], 1
    %487 = vsyncpa %s486, 1

</llo_original>
